<compile_context>
chip_gen: v5e
topology: v5e:2x2
jax: 0.10.0
libtpu: 0.0.40
codegen_flags: <defaults>
</compile_context>

<pallas_src>
import functools

import jax
import jax.numpy as jnp
from jax.experimental import pallas as pl
from jax.experimental.pallas import tpu as pltpu

LANE = 128
MiB = 1 << 20


def _round_up(v, m):
    return ((v + m - 1) // m) * m


# ----------------------------------------------------------------------------
# Generation / VMEM discovery (best-effort, with safe fallbacks)
# ----------------------------------------------------------------------------
def _tpu_generation():
    try:
        kind = jax.devices()[0].device_kind.lower()
    except Exception:
        kind = ""
    if "v7" in kind or "7x" in kind:
        return 7
    if "v6" in kind:
        return 6
    return 5  # v5e and older: conservative defaults (128-wide MXU, f32 EUP)


def _vmem_capacity_bytes(gen):
    try:
        return int(pltpu.get_tpu_info().vmem_capacity_bytes)
    except Exception:
        return 64 * MiB if gen >= 7 else 128 * MiB


def _select_tb(batch, gen):
    # 256-row tiles fill v6e/v7x's 256x256 MXUs; v5e's MXU is 128x128.
    base = 128 if gen <= 5 else 256
    tb = min(base, _round_up(max(batch, 1), 16))  # adapt to small batches
    if gen >= 7:
        # v7x has 2 TensorCores: keep >= 2 grid steps when the batch allows it
        # so dimension_semantics=("parallel",) can shard across both cores.
        while tb > 16 and _round_up(max(batch, 1), tb) // tb < 2:
            tb = _round_up(tb // 2, 16)
    return tb


def _vmem_limit_bytes(tb, n_pad, latent_pad, padded_params, capacity,
                      single_buffer_weights):
    w_bufs = 1 if single_buffer_weights else 2
    footprint = (2 * tb * n_pad * 4            # f32 activation tile, 2 buffers
                 + 2 * tb * latent_pad * 4     # f32 output tile, 2 buffers
                 + w_bufs * sum(int(w.size) * 2 + int(b.size) * 4
                                for w, b in padded_params))
    ceiling = 48 * MiB if capacity <= 64 * MiB else 100 * MiB
    return int(min(ceiling, max(16 * MiB, 2 * footprint + 4 * MiB)))


# ----------------------------------------------------------------------------
# Pallas kernel: full MLP forward for one batch tile (all matmuls fused)
# ----------------------------------------------------------------------------
def make_encoder_kernel(num_linears, tanh_dtype):
    def kernel(x_ref, *refs):
        out_ref = refs[-1]
        wb = refs[:-1]                              # (w0, b0, w1, b1, ...)

        # Cast-to-bf16 happens here (VPU) instead of a separate XLA pass.
        h = x_ref[...].astype(jnp.bfloat16)         # [TB, n_pad]
        for li in range(num_linears):
            w = wb[2 * li][...]                     # [in_pad, out_pad] bf16
            b = wb[2 * li + 1][...]                 # [1, out_pad]      f32
            acc = jnp.dot(h, w, preferred_element_type=jnp.float32) + b
            if li < num_linears - 1:
                # bf16 tanh on v6e/v7x (EUP bf16 path), f32 on v5e.
                h = jnp.tanh(acc.astype(tanh_dtype)).astype(jnp.bfloat16)
            else:
                out_ref[...] = acc.astype(out_ref.dtype)

    return kernel


# ----------------------------------------------------------------------------
# Parameter prep: pad every Linear to 128-lane multiples, cast weights to bf16
# ----------------------------------------------------------------------------
def prepare_params(params):
    prepped = []
    for w, b in params:
        n_in, n_out = w.shape
        in_pad = _round_up(n_in, LANE)
        out_pad = _round_up(n_out, LANE)
        wp = jnp.zeros((in_pad, out_pad), jnp.bfloat16)
        wp = wp.at[:n_in, :n_out].set(w.astype(jnp.bfloat16))
        bp = jnp.zeros((1, out_pad), jnp.float32)
        bp = bp.at[:, :n_out].set(b.reshape(1, -1).astype(jnp.float32))
        prepped.append((wp, bp))
    return prepped


# ----------------------------------------------------------------------------
# Jitted implementation
# ----------------------------------------------------------------------------
@functools.partial(
    jax.jit,
    static_argnames=("latent_dim", "tb", "single_buffer_weights",
                     "tanh_bf16", "vmem_limit_bytes"),
)
def _encoder_forward_jit(images, padded_params, *, latent_dim, tb,
                         single_buffer_weights, tanh_bf16, vmem_limit_bytes):
    B = images.shape[0]
    x = images.reshape(B, -1).astype(jnp.float32)   # flatten (== torch .view)
    n = x.shape[1]

    n_pad = padded_params[0][0].shape[0]
    latent_pad = padded_params[-1][0].shape[1]
    num_linears = len(padded_params)

    # Pad only when needed so every block stays (8,128)-aligned / lane-dense.
    if n_pad > n:
        x = jnp.pad(x, ((0, 0), (0, n_pad - n)))
    B_pad = _round_up(max(B, 1), tb)
    if B_pad > B:
        x = jnp.pad(x, ((0, B_pad - B), (0, 0)))

    grid = (B_pad // tb,)

    # Weights/biases: whole array, constant index -> VMEM-resident; single
    # buffer (no re-fetch across steps) when supported.
    weight_kwargs = (
        {"pipeline_mode": pl.Buffered(1)} if single_buffer_weights else {}
    )
    in_specs = [pl.BlockSpec((tb, n_pad), lambda i: (i, 0))]
    flat_params = []
    for w, b in padded_params:
        in_specs.append(pl.BlockSpec(w.shape, lambda i: (0, 0), **weight_kwargs))
        in_specs.append(pl.BlockSpec(b.shape, lambda i: (0, 0), **weight_kwargs))
        flat_params += [w, b]
    out_spec = pl.BlockSpec((tb, latent_pad), lambda i: (i, 0))

    flops = 2 * B_pad * sum(int(w.shape[0]) * int(w.shape[1])
                            for w, _ in padded_params)
    transcendentals = B_pad * sum(int(w.shape[1]) for w, _ in padded_params[:-1])
    bytes_accessed = (int(x.size) * 4
                      + sum(int(w.size) * 2 + int(b.size) * 4
                            for w, b in padded_params)
                      + B_pad * latent_pad * 4)

    tanh_dtype = jnp.bfloat16 if tanh_bf16 else jnp.float32

    out = pl.pallas_call(
        make_encoder_kernel(num_linears, tanh_dtype),
        out_shape=jax.ShapeDtypeStruct((B_pad, latent_pad), jnp.float32),
        grid=grid,
        in_specs=in_specs,
        out_specs=out_spec,
        compiler_params=pltpu.CompilerParams(
            dimension_semantics=("parallel",),
            vmem_limit_bytes=vmem_limit_bytes,
        ),
        cost_estimate=pl.CostEstimate(
            flops=flops,
            transcendentals=transcendentals,
            bytes_accessed=bytes_accessed,
        ),
    )(x, *flat_params)

    return out[:B, :latent_dim]


# ----------------------------------------------------------------------------
# Host-side wrapper: generation-aware tuning + safe fallback
# ----------------------------------------------------------------------------
def encoder_forward(images, padded_params, *, latent_dim):
    """images: [B, C, H, W] f32 (NCHW like PyTorch). Returns [B, latent_dim] f32."""
    B = images.shape[0]
    gen = _tpu_generation()
    capacity = _vmem_capacity_bytes(gen)

    n_pad = padded_params[0][0].shape[0]
    latent_pad = padded_params[-1][0].shape[1]
    tb = _select_tb(B, gen)
    tanh_bf16 = gen >= 6

    try:
        vmem_limit = _vmem_limit_bytes(tb, n_pad, latent_pad, padded_params,
                                       capacity, single_buffer_weights=True)
        out = _encoder_forward_jit(
            images, padded_params, latent_dim=latent_dim, tb=tb,
            single_buffer_weights=True, tanh_bf16=tanh_bf16,
            vmem_limit_bytes=vmem_limit)
        return jax.block_until_ready(out)
    except Exception:
        # pl.Buffered(1) not supported on this JAX/Mosaic version -> default
        # double-buffered weights (correctness identical, just more VMEM).
        vmem_limit = _vmem_limit_bytes(tb, n_pad, latent_pad, padded_params,
                                       capacity, single_buffer_weights=False)
        out = _encoder_forward_jit(
            images, padded_params, latent_dim=latent_dim, tb=tb,
            single_buffer_weights=False, tanh_bf16=tanh_bf16,
            vmem_limit_bytes=vmem_limit)
        return jax.block_until_ready(out)


# ----------------------------------------------------------------------------
# Deterministic parameter init (mimics nn.Linear's U(-1/sqrt(fan_in), ...))
# ----------------------------------------------------------------------------
def init_linear(key, n_in, n_out):
    kw, kb = jax.random.split(key)
    bound = 1.0 / (n_in ** 0.5)
    # stored as [in, out] so the kernel computes x @ W + b
    w = jax.random.uniform(kw, (n_in, n_out), jnp.float32, -bound, bound)
    b = jax.random.uniform(kb, (1, n_out), jnp.float32, -bound, bound)
    return w, b


def make_encoder_params(key, n, latent_dim, hidden_dim, num_layers):
    keys = jax.random.split(key, num_layers + 1)
    params = [init_linear(keys[0], n, hidden_dim)]
    for i in range(1, num_layers):
        params.append(init_linear(keys[i], hidden_dim, hidden_dim))
    params.append(init_linear(keys[num_layers], hidden_dim, latent_dim))
    return params


# Pure-JAX reference mirroring the kernel's numeric path
def encoder_ref(images, params, tanh_bf16):
    h = images.reshape(images.shape[0], -1)
    tanh_dtype = jnp.bfloat16 if tanh_bf16 else jnp.float32
    for i, (w, b) in enumerate(params):
        acc = jnp.dot(h.astype(jnp.bfloat16), w.astype(jnp.bfloat16),
                      preferred_element_type=jnp.float32) + b
        if i < len(params) - 1:
            h = jnp.tanh(acc.astype(tanh_dtype)).astype(jnp.float32)
        else:
            h = acc
    return h


if __name__ == "__main__":
    # Small shapes consistent with the module: images [B, C, H, W],
    # n = C*H*W, Encoder(n, latent_dim, hidden_dim, num_layers=3, resid=False)
    B, C, H, W = 8, 2, 8, 8
    n = C * H * W                  # 128
    hidden_dim = 64
    latent_dim = 16
    num_layers = 3

    key = jax.random.PRNGKey(0)
    k_img, k_par = jax.random.split(key)
    images = jax.random.normal(k_img, (B, C, H, W), jnp.float32)
    params = make_encoder_params(k_par, n, latent_dim, hidden_dim, num_layers)
    padded_params = prepare_params(params)

    z = encoder_forward(images, padded_params, latent_dim=latent_dim)

    z_ref = encoder_ref(images, params, tanh_bf16=(_tpu_generation() >= 6))
    assert z.shape == (B, latent_dim)
    assert jnp.allclose(z, z_ref, atol=2e-2, rtol=2e-2), \
        float(jnp.max(jnp.abs(z - z_ref)))

    print("KERNEL_OK")
</pallas_src>

<mosaic_0001>
module attributes {stable_mosaic.version = 11 : i64} {
  func.func @kernel(%arg0: i32, %arg1: memref<16x128xf32, #tpu.memory_space<vmem>>, %arg2: memref<128x128xbf16, #tpu.memory_space<vmem>>, %arg3: memref<1x128xf32, #tpu.memory_space<vmem>>, %arg4: memref<128x128xbf16, #tpu.memory_space<vmem>>, %arg5: memref<1x128xf32, #tpu.memory_space<vmem>>, %arg6: memref<128x128xbf16, #tpu.memory_space<vmem>>, %arg7: memref<1x128xf32, #tpu.memory_space<vmem>>, %arg8: memref<128x128xbf16, #tpu.memory_space<vmem>>, %arg9: memref<1x128xf32, #tpu.memory_space<vmem>>, %arg10: memref<16x128xf32, #tpu.memory_space<vmem>>) attributes {dimension_semantics = [#tpu.dimension_semantics<parallel>], iteration_bounds = array<i64: 1>, scalar_prefetch = 0 : i64, scratch_operands = 0 : i64, tpu.core_type = #tpu.core_type<tc>, window_params = [{transform_indices = @transform_0, window_bounds = array<i64: 16, 128>}, {pipeline_mode = #tpu.pipeline_mode<synchronous>, transform_indices = @transform_1, window_bounds = array<i64: 128, 128>}, {pipeline_mode = #tpu.pipeline_mode<synchronous>, transform_indices = @transform_2, window_bounds = array<i64: 1, 128>}, {pipeline_mode = #tpu.pipeline_mode<synchronous>, transform_indices = @transform_3, window_bounds = array<i64: 128, 128>}, {pipeline_mode = #tpu.pipeline_mode<synchronous>, transform_indices = @transform_4, window_bounds = array<i64: 1, 128>}, {pipeline_mode = #tpu.pipeline_mode<synchronous>, transform_indices = @transform_5, window_bounds = array<i64: 128, 128>}, {pipeline_mode = #tpu.pipeline_mode<synchronous>, transform_indices = @transform_6, window_bounds = array<i64: 1, 128>}, {pipeline_mode = #tpu.pipeline_mode<synchronous>, transform_indices = @transform_7, window_bounds = array<i64: 128, 128>}, {pipeline_mode = #tpu.pipeline_mode<synchronous>, transform_indices = @transform_8, window_bounds = array<i64: 1, 128>}, {transform_indices = @transform_9, window_bounds = array<i64: 16, 128>}]} {
    %c0 = arith.constant 0 : index
    %c0_0 = arith.constant 0 : index
    %0 = vector.load %arg1[%c0, %c0_0] : memref<16x128xf32, #tpu.memory_space<vmem>>, vector<16x128xf32>
    %1 = arith.truncf %0 : vector<16x128xf32> to vector<16x128xbf16>
    %c0_1 = arith.constant 0 : index
    %c0_2 = arith.constant 0 : index
    %2 = vector.load %arg2[%c0_1, %c0_2] : memref<128x128xbf16, #tpu.memory_space<vmem>>, vector<128x128xbf16>
    %c0_3 = arith.constant 0 : index
    %c0_4 = arith.constant 0 : index
    %3 = vector.load %arg3[%c0_3, %c0_4] : memref<1x128xf32, #tpu.memory_space<vmem>>, vector<1x128xf32>
    %cst = arith.constant dense<0.000000e+00> : vector<16x128xf32>
    %4 = tpu.matmul %1, %2, %cst {dimension_numbers = #tpu.dot_dimension_numbers<[1], [0], [0], [1], [0, 0, 1, 1], [], []>} : vector<16x128xbf16>, vector<128x128xbf16>, vector<16x128xf32> -> vector<16x128xf32>
    %5 = vector.broadcast %3 : vector<1x128xf32> to vector<16x128xf32>
    %6 = arith.addf %4, %5 : vector<16x128xf32>
    %7 = math.tanh %6 : vector<16x128xf32>
    %8 = arith.truncf %7 : vector<16x128xf32> to vector<16x128xbf16>
    %c0_5 = arith.constant 0 : index
    %c0_6 = arith.constant 0 : index
    %9 = vector.load %arg4[%c0_5, %c0_6] : memref<128x128xbf16, #tpu.memory_space<vmem>>, vector<128x128xbf16>
    %c0_7 = arith.constant 0 : index
    %c0_8 = arith.constant 0 : index
    %10 = vector.load %arg5[%c0_7, %c0_8] : memref<1x128xf32, #tpu.memory_space<vmem>>, vector<1x128xf32>
    %cst_9 = arith.constant dense<0.000000e+00> : vector<16x128xf32>
    %11 = tpu.matmul %8, %9, %cst_9 {dimension_numbers = #tpu.dot_dimension_numbers<[1], [0], [0], [1], [0, 0, 1, 1], [], []>} : vector<16x128xbf16>, vector<128x128xbf16>, vector<16x128xf32> -> vector<16x128xf32>
    %12 = vector.broadcast %10 : vector<1x128xf32> to vector<16x128xf32>
    %13 = arith.addf %11, %12 : vector<16x128xf32>
    %14 = math.tanh %13 : vector<16x128xf32>
    %15 = arith.truncf %14 : vector<16x128xf32> to vector<16x128xbf16>
    %c0_10 = arith.constant 0 : index
    %c0_11 = arith.constant 0 : index
    %16 = vector.load %arg6[%c0_10, %c0_11] : memref<128x128xbf16, #tpu.memory_space<vmem>>, vector<128x128xbf16>
    %c0_12 = arith.constant 0 : index
    %c0_13 = arith.constant 0 : index
    %17 = vector.load %arg7[%c0_12, %c0_13] : memref<1x128xf32, #tpu.memory_space<vmem>>, vector<1x128xf32>
    %cst_14 = arith.constant dense<0.000000e+00> : vector<16x128xf32>
    %18 = tpu.matmul %15, %16, %cst_14 {dimension_numbers = #tpu.dot_dimension_numbers<[1], [0], [0], [1], [0, 0, 1, 1], [], []>} : vector<16x128xbf16>, vector<128x128xbf16>, vector<16x128xf32> -> vector<16x128xf32>
    %19 = vector.broadcast %17 : vector<1x128xf32> to vector<16x128xf32>
    %20 = arith.addf %18, %19 : vector<16x128xf32>
    %21 = math.tanh %20 : vector<16x128xf32>
    %22 = arith.truncf %21 : vector<16x128xf32> to vector<16x128xbf16>
    %c0_15 = arith.constant 0 : index
    %c0_16 = arith.constant 0 : index
    %23 = vector.load %arg8[%c0_15, %c0_16] : memref<128x128xbf16, #tpu.memory_space<vmem>>, vector<128x128xbf16>
    %c0_17 = arith.constant 0 : index
    %c0_18 = arith.constant 0 : index
    %24 = vector.load %arg9[%c0_17, %c0_18] : memref<1x128xf32, #tpu.memory_space<vmem>>, vector<1x128xf32>
    %cst_19 = arith.constant dense<0.000000e+00> : vector<16x128xf32>
    %25 = tpu.matmul %22, %23, %cst_19 {dimension_numbers = #tpu.dot_dimension_numbers<[1], [0], [0], [1], [0, 0, 1, 1], [], []>} : vector<16x128xbf16>, vector<128x128xbf16>, vector<16x128xf32> -> vector<16x128xf32>
    %26 = vector.broadcast %24 : vector<1x128xf32> to vector<16x128xf32>
    %27 = arith.addf %25, %26 : vector<16x128xf32>
    %c0_20 = arith.constant 0 : index
    %c0_21 = arith.constant 0 : index
    %28 = vector.load %arg10[%c0_20, %c0_21] : memref<16x128xf32, #tpu.memory_space<vmem>>, vector<16x128xf32>
    tpu.vector_store %arg10[%c0_20, %c0_21], %27 {strides = array<i32>} : memref<16x128xf32, #tpu.memory_space<vmem>>, vector<16x128xf32>,
    return
  }
  func.func @transform_0(%arg0: i32) -> (i32, i32) {
    %c0_i32 = arith.constant 0 : i32
    %c0_i32_0 = arith.constant 0 : i32
    return %arg0, %c0_i32 : i32, i32
  }
  func.func @transform_1(%arg0: i32) -> (i32, i32) {
    %c0_i32 = arith.constant 0 : i32
    %c0_i32_0 = arith.constant 0 : i32
    %c0_i32_1 = arith.constant 0 : i32
    return %c0_i32, %c0_i32_0 : i32, i32
  }
  func.func @transform_2(%arg0: i32) -> (i32, i32) {
    %c0_i32 = arith.constant 0 : i32
    %c0_i32_0 = arith.constant 0 : i32
    %c0_i32_1 = arith.constant 0 : i32
    return %c0_i32, %c0_i32_0 : i32, i32
  }
  func.func @transform_3(%arg0: i32) -> (i32, i32) {
    %c0_i32 = arith.constant 0 : i32
    %c0_i32_0 = arith.constant 0 : i32
    %c0_i32_1 = arith.constant 0 : i32
    return %c0_i32, %c0_i32_0 : i32, i32
  }
  func.func @transform_4(%arg0: i32) -> (i32, i32) {
    %c0_i32 = arith.constant 0 : i32
    %c0_i32_0 = arith.constant 0 : i32
    %c0_i32_1 = arith.constant 0 : i32
    return %c0_i32, %c0_i32_0 : i32, i32
  }
  func.func @transform_5(%arg0: i32) -> (i32, i32) {
    %c0_i32 = arith.constant 0 : i32
    %c0_i32_0 = arith.constant 0 : i32
    %c0_i32_1 = arith.constant 0 : i32
    return %c0_i32, %c0_i32_0 : i32, i32
  }
  func.func @transform_6(%arg0: i32) -> (i32, i32) {
    %c0_i32 = arith.constant 0 : i32
    %c0_i32_0 = arith.constant 0 : i32
    %c0_i32_1 = arith.constant 0 : i32
    return %c0_i32, %c0_i32_0 : i32, i32
  }
  func.func @transform_7(%arg0: i32) -> (i32, i32) {
    %c0_i32 = arith.constant 0 : i32
    %c0_i32_0 = arith.constant 0 : i32
    %c0_i32_1 = arith.constant 0 : i32
    return %c0_i32, %c0_i32_0 : i32, i32
  }
  func.func @transform_8(%arg0: i32) -> (i32, i32) {
    %c0_i32 = arith.constant 0 : i32
    %c0_i32_0 = arith.constant 0 : i32
    %c0_i32_1 = arith.constant 0 : i32
    return %c0_i32, %c0_i32_0 : i32, i32
  }
  func.func @transform_9(%arg0: i32) -> (i32, i32) {
    %c0_i32 = arith.constant 0 : i32
    %c0_i32_0 = arith.constant 0 : i32
    return %arg0, %c0_i32 : i32, i32
  }
}

module attributes {stable_mosaic.version = 11 : i64} {
  func.func @kernel(%arg0: i32, %arg1: memref<16x128xf32, #tpu.memory_space<vmem>>, %arg2: memref<128x128xbf16, #tpu.memory_space<vmem>>, %arg3: memref<1x128xf32, #tpu.memory_space<vmem>>, %arg4: memref<128x128xbf16, #tpu.memory_space<vmem>>, %arg5: memref<1x128xf32, #tpu.memory_space<vmem>>, %arg6: memref<128x128xbf16, #tpu.memory_space<vmem>>, %arg7: memref<1x128xf32, #tpu.memory_space<vmem>>, %arg8: memref<128x128xbf16, #tpu.memory_space<vmem>>, %arg9: memref<1x128xf32, #tpu.memory_space<vmem>>, %arg10: memref<16x128xf32, #tpu.memory_space<vmem>>) attributes {dimension_semantics = [#tpu.dimension_semantics<parallel>], iteration_bounds = array<i64: 1>, scalar_prefetch = 0 : i64, scratch_operands = 0 : i64, tpu.core_type = #tpu.core_type<tc>, window_params = [{transform_indices = @transform_0, window_bounds = array<i64: 16, 128>}, {pipeline_mode = #tpu.pipeline_mode<synchronous>, transform_indices = @transform_1, window_bounds = array<i64: 128, 128>}, {pipeline_mode = #tpu.pipeline_mode<synchronous>, transform_indices = @transform_2, window_bounds = array<i64: 1, 128>}, {pipeline_mode = #tpu.pipeline_mode<synchronous>, transform_indices = @transform_3, window_bounds = array<i64: 128, 128>}, {pipeline_mode = #tpu.pipeline_mode<synchronous>, transform_indices = @transform_4, window_bounds = array<i64: 1, 128>}, {pipeline_mode = #tpu.pipeline_mode<synchronous>, transform_indices = @transform_5, window_bounds = array<i64: 128, 128>}, {pipeline_mode = #tpu.pipeline_mode<synchronous>, transform_indices = @transform_6, window_bounds = array<i64: 1, 128>}, {pipeline_mode = #tpu.pipeline_mode<synchronous>, transform_indices = @transform_7, window_bounds = array<i64: 128, 128>}, {pipeline_mode = #tpu.pipeline_mode<synchronous>, transform_indices = @transform_8, window_bounds = array<i64: 1, 128>}, {transform_indices = @transform_9, window_bounds = array<i64: 16, 128>}]} {
    %c0 = arith.constant 0 : index
    %c0_0 = arith.constant 0 : index
    %0 = vector.load %arg1[%c0, %c0_0] : memref<16x128xf32, #tpu.memory_space<vmem>>, vector<16x128xf32>
    %1 = arith.truncf %0 : vector<16x128xf32> to vector<16x128xbf16>
    %c0_1 = arith.constant 0 : index
    %c0_2 = arith.constant 0 : index
    %2 = vector.load %arg2[%c0_1, %c0_2] : memref<128x128xbf16, #tpu.memory_space<vmem>>, vector<128x128xbf16>
    %c0_3 = arith.constant 0 : index
    %c0_4 = arith.constant 0 : index
    %3 = vector.load %arg3[%c0_3, %c0_4] : memref<1x128xf32, #tpu.memory_space<vmem>>, vector<1x128xf32>
    %cst = arith.constant dense<0.000000e+00> : vector<16x128xf32>
    %4 = tpu.matmul %1, %2, %cst {dimension_numbers = #tpu.dot_dimension_numbers<[1], [0], [0], [1], [0, 0, 1, 1], [], []>} : vector<16x128xbf16>, vector<128x128xbf16>, vector<16x128xf32> -> vector<16x128xf32>
    %5 = vector.broadcast %3 : vector<1x128xf32> to vector<16x128xf32>
    %6 = arith.addf %4, %5 : vector<16x128xf32>
    %7 = math.tanh %6 : vector<16x128xf32>
    %8 = arith.truncf %7 : vector<16x128xf32> to vector<16x128xbf16>
    %c0_5 = arith.constant 0 : index
    %c0_6 = arith.constant 0 : index
    %9 = vector.load %arg4[%c0_5, %c0_6] : memref<128x128xbf16, #tpu.memory_space<vmem>>, vector<128x128xbf16>
    %c0_7 = arith.constant 0 : index
    %c0_8 = arith.constant 0 : index
    %10 = vector.load %arg5[%c0_7, %c0_8] : memref<1x128xf32, #tpu.memory_space<vmem>>, vector<1x128xf32>
    %cst_9 = arith.constant dense<0.000000e+00> : vector<16x128xf32>
    %11 = tpu.matmul %8, %9, %cst_9 {dimension_numbers = #tpu.dot_dimension_numbers<[1], [0], [0], [1], [0, 0, 1, 1], [], []>} : vector<16x128xbf16>, vector<128x128xbf16>, vector<16x128xf32> -> vector<16x128xf32>
    %12 = vector.broadcast %10 : vector<1x128xf32> to vector<16x128xf32>
    %13 = arith.addf %11, %12 : vector<16x128xf32>
    %14 = math.tanh %13 : vector<16x128xf32>
    %15 = arith.truncf %14 : vector<16x128xf32> to vector<16x128xbf16>
    %c0_10 = arith.constant 0 : index
    %c0_11 = arith.constant 0 : index
    %16 = vector.load %arg6[%c0_10, %c0_11] : memref<128x128xbf16, #tpu.memory_space<vmem>>, vector<128x128xbf16>
    %c0_12 = arith.constant 0 : index
    %c0_13 = arith.constant 0 : index
    %17 = vector.load %arg7[%c0_12, %c0_13] : memref<1x128xf32, #tpu.memory_space<vmem>>, vector<1x128xf32>
    %cst_14 = arith.constant dense<0.000000e+00> : vector<16x128xf32>
    %18 = tpu.matmul %15, %16, %cst_14 {dimension_numbers = #tpu.dot_dimension_numbers<[1], [0], [0], [1], [0, 0, 1, 1], [], []>} : vector<16x128xbf16>, vector<128x128xbf16>, vector<16x128xf32> -> vector<16x128xf32>
    %19 = vector.broadcast %17 : vector<1x128xf32> to vector<16x128xf32>
    %20 = arith.addf %18, %19 : vector<16x128xf32>
    %21 = math.tanh %20 : vector<16x128xf32>
    %22 = arith.truncf %21 : vector<16x128xf32> to vector<16x128xbf16>
    %c0_15 = arith.constant 0 : index
    %c0_16 = arith.constant 0 : index
    %23 = vector.load %arg8[%c0_15, %c0_16] : memref<128x128xbf16, #tpu.memory_space<vmem>>, vector<128x128xbf16>
    %c0_17 = arith.constant 0 : index
    %c0_18 = arith.constant 0 : index
    %24 = vector.load %arg9[%c0_17, %c0_18] : memref<1x128xf32, #tpu.memory_space<vmem>>, vector<1x128xf32>
    %cst_19 = arith.constant dense<0.000000e+00> : vector<16x128xf32>
    %25 = tpu.matmul %22, %23, %cst_19 {dimension_numbers = #tpu.dot_dimension_numbers<[1], [0], [0], [1], [0, 0, 1, 1], [], []>} : vector<16x128xbf16>, vector<128x128xbf16>, vector<16x128xf32> -> vector<16x128xf32>
    %26 = vector.broadcast %24 : vector<1x128xf32> to vector<16x128xf32>
    %27 = arith.addf %25, %26 : vector<16x128xf32>
    %c0_20 = arith.constant 0 : index
    %c0_21 = arith.constant 0 : index
    %28 = vector.load %arg10[%c0_20, %c0_21] : memref<16x128xf32, #tpu.memory_space<vmem>>, vector<16x128xf32>
    tpu.vector_store %arg10[%c0_20, %c0_21], %27 {strides = array<i32>} : memref<16x128xf32, #tpu.memory_space<vmem>>, vector<16x128xf32>,
    return
  }
  func.func @transform_0(%arg0: i32) -> (i32, i32) {
    %c0_i32 = arith.constant 0 : i32
    %c0_i32_0 = arith.constant 0 : i32
    return %arg0, %c0_i32 : i32, i32
  }
  func.func @transform_1(%arg0: i32) -> (i32, i32) {
    %c0_i32 = arith.constant 0 : i32
    %c0_i32_0 = arith.constant 0 : i32
    %c0_i32_1 = arith.constant 0 : i32
    return %c0_i32, %c0_i32_0 : i32, i32
  }
  func.func @transform_2(%arg0: i32) -> (i32, i32) {
    %c0_i32 = arith.constant 0 : i32
    %c0_i32_0 = arith.constant 0 : i32
    %c0_i32_1 = arith.constant 0 : i32
    return %c0_i32, %c0_i32_0 : i32, i32
  }
  func.func @transform_3(%arg0: i32) -> (i32, i32) {
    %c0_i32 = arith.constant 0 : i32
    %c0_i32_0 = arith.constant 0 : i32
    %c0_i32_1 = arith.constant 0 : i32
    return %c0_i32, %c0_i32_0 : i32, i32
  }
  func.func @transform_4(%arg0: i32) -> (i32, i32) {
    %c0_i32 = arith.constant 0 : i32
    %c0_i32_0 = arith.constant 0 : i32
    %c0_i32_1 = arith.constant 0 : i32
    return %c0_i32, %c0_i32_0 : i32, i32
  }
  func.func @transform_5(%arg0: i32) -> (i32, i32) {
    %c0_i32 = arith.constant 0 : i32
    %c0_i32_0 = arith.constant 0 : i32
    %c0_i32_1 = arith.constant 0 : i32
    return %c0_i32, %c0_i32_0 : i32, i32
  }
  func.func @transform_6(%arg0: i32) -> (i32, i32) {
    %c0_i32 = arith.constant 0 : i32
    %c0_i32_0 = arith.constant 0 : i32
    %c0_i32_1 = arith.constant 0 : i32
    return %c0_i32, %c0_i32_0 : i32, i32
  }
  func.func @transform_7(%arg0: i32) -> (i32, i32) {
    %c0_i32 = arith.constant 0 : i32
    %c0_i32_0 = arith.constant 0 : i32
    %c0_i32_1 = arith.constant 0 : i32
    return %c0_i32, %c0_i32_0 : i32, i32
  }
  func.func @transform_8(%arg0: i32) -> (i32, i32) {
    %c0_i32 = arith.constant 0 : i32
    %c0_i32_0 = arith.constant 0 : i32
    %c0_i32_1 = arith.constant 0 : i32
    return %c0_i32, %c0_i32_0 : i32, i32
  }
  func.func @transform_9(%arg0: i32) -> (i32, i32) {
    %c0_i32 = arith.constant 0 : i32
    %c0_i32_0 = arith.constant 0 : i32
    return %arg0, %c0_i32 : i32, i32
  }
}

</mosaic_0001>

<llo_original>
// kernel: _encoder_forward_jit.1
$region0: #{_encoder_forward_jit.1}
  #allocation0 [shape = 'u32[]', space=smem, size = 0x4, offset = 0x4, fixed_abs, tag = 'smem constant byte address 0x4 - core index']
  #allocation1 [shape = 'u32[72,128]{1,0:T(1,128)}', space=vmem, size = 0x9000, scoped, tag = 'internal scratch']
  %s0 = inlined_call_operand.vmem [shape: f32[16,128], index: 0, kind: input, shape index: {}]
  %s1 = inlined_call_operand.vmem [shape: bf16[128,128], index: 1, kind: input, shape index: {}]
  %s2 = inlined_call_operand.vmem [shape: f32[1,128], index: 2, kind: input, shape index: {}]
  %s3 = inlined_call_operand.vmem [shape: bf16[128,128], index: 3, kind: input, shape index: {}]
  %s4 = inlined_call_operand.vmem [shape: f32[1,128], index: 4, kind: input, shape index: {}]
  %s5 = inlined_call_operand.hbm [shape: bf16[128,128], index: 5, kind: input, shape index: {}]
  %s6 = inlined_call_operand.vmem [shape: f32[1,128], index: 6, kind: input, shape index: {}]
  %s7 = inlined_call_operand.hbm [shape: bf16[128,128], index: 7, kind: input, shape index: {}]
  %s8 = inlined_call_operand.vmem [shape: f32[1,128], index: 8, kind: input, shape index: {}]
  %s9 = inlined_call_operand.vmem [shape: f32[16,128], index: 9, kind: output, shape index: {}]
  %s10 = sld [smem:[#allocation0]]
  $region54: #{_encoder_forward_jit.1} parent=0
    _
  %s12 = ssub.s32 1, %s10
  %s13 = scalar_select 0, %s12, %s10
  $region1: #{_encoder_forward_jit.1} parent=0
    #allocation2 [shape = 'u8[32768]{0}', space=vmem, size = 0x8000, scoped, tag = 'input window, operand 5, single buffered']
    #allocation3 [shape = 's32[1]{0}', space=sflag, size = 0x4, scoped, tag = 'scoped memory for _encoder_forward_jit.1']
    #allocation4 [shape = 'u8[32768]{0}', space=vmem, size = 0x8000, scoped, tag = 'input window, operand 7, single buffered']
    #allocation5 [shape = 's32[1]{0}', space=sflag, size = 0x4, scoped, tag = 'scoped memory for _encoder_forward_jit.1']
    %14 = vsyncpa [#allocation3], 0
    %15 = vsyncpa [#allocation5], 0
    // Predicated region
    $region2: #{_encoder_forward_jit.1} parent=1 // pred_check
      _
    $region3: #{_encoder_forward_jit.1} parent=1 // pred_check_branch
      %17 = sbr.rel (0) target = $region5
    $region4: #{_encoder_forward_jit.1} parent=1 // pred_region
      _
    $region5: #{_encoder_forward_jit.1} parent=1 // pred_fallthru
      _
    // Predicated region
    $region6: #{_encoder_forward_jit.1} parent=1 // pred_check
      _
    $region7: #{_encoder_forward_jit.1} parent=1 // pred_check_branch
      %19 = sbr.rel (0) target = $region9
    $region8: #{_encoder_forward_jit.1} parent=1 // pred_region
      _
    $region9: #{_encoder_forward_jit.1} parent=1 // pred_fallthru
      _
    // Predicated region
    $region10: #{_encoder_forward_jit.1} parent=1 // pred_check
      _
    $region11: #{_encoder_forward_jit.1} parent=1 // pred_check_branch
      %21 = sbr.rel (0) target = $region13
    $region12: #{_encoder_forward_jit.1} parent=1 // pred_region
      _
    $region13: #{_encoder_forward_jit.1} parent=1 // pred_fallthru
      _
    // Predicated region
    $region14: #{_encoder_forward_jit.1} parent=1 // pred_check
      _
    $region15: #{_encoder_forward_jit.1} parent=1 // pred_check_branch
      %23 = sbr.rel (0) target = $region17
    $region16: #{_encoder_forward_jit.1} parent=1 // pred_region
      _
    $region17: #{_encoder_forward_jit.1} parent=1 // pred_fallthru
      _
    // Predicated region
    $region18: #{_encoder_forward_jit.1} parent=1 // pred_check
      _
    $region19: #{_encoder_forward_jit.1} parent=1 // pred_check_branch
      %25 = sbr.rel (0) target = $region21
    $region20: #{_encoder_forward_jit.1} parent=1 // pred_region
      _
    $region21: #{_encoder_forward_jit.1} parent=1 // pred_fallthru
      _
    // Predicated region
    $region22: #{_encoder_forward_jit.1} parent=1 // pred_check
      _
    $region23: #{_encoder_forward_jit.1} parent=1 // pred_check_branch
      %27 = sbr.rel (0) target = $region25
    $region24: #{_encoder_forward_jit.1} parent=1 // pred_region
      %29 = vsyncadd [#allocation3], 0
      %s30 = sshll.u32 %s5, 4
      %s31 = int_to_ptr.hbm [resolvable:$true] %s30
      %s32 = sshll.u32 [#allocation2], 4
      %s33 = int_to_ptr.vmem [resolvable:$true] %s32
      %38 = dma.hbm_to_vmem [thread:$0]  %s31, 1024, %s33, [#allocation3], 64, 64, 4
    $region25: #{_encoder_forward_jit.1} parent=1 // pred_fallthru
      _
    // Predicated region
    $region26: #{_encoder_forward_jit.1} parent=1 // pred_check
      _
    $region27: #{_encoder_forward_jit.1} parent=1 // pred_check_branch
      %40 = sbr.rel (0) target = $region29
    $region28: #{_encoder_forward_jit.1} parent=1 // pred_region
      _
    $region29: #{_encoder_forward_jit.1} parent=1 // pred_fallthru
      _
    // Predicated region
    $region30: #{_encoder_forward_jit.1} parent=1 // pred_check
      _
    $region31: #{_encoder_forward_jit.1} parent=1 // pred_check_branch
      %42 = sbr.rel (0) target = $region33
    $region32: #{_encoder_forward_jit.1} parent=1 // pred_region
      %44 = vsyncadd [#allocation5], 0
      %s45 = sshll.u32 %s7, 4
      %s46 = int_to_ptr.hbm [resolvable:$true] %s45
      %s47 = sshll.u32 [#allocation4], 4
      %s48 = int_to_ptr.vmem [resolvable:$true] %s47
      %53 = dma.hbm_to_vmem [thread:$0]  %s46, 1024, %s48, [#allocation5], 64, 64, 4
    $region33: #{_encoder_forward_jit.1} parent=1 // pred_fallthru
      _
    // Predicated region
    $region34: #{_encoder_forward_jit.1} parent=1 // pred_check
      _
    $region35: #{_encoder_forward_jit.1} parent=1 // pred_check_branch
      %55 = sbr.rel (0) target = $region37
    $region36: #{_encoder_forward_jit.1} parent=1 // pred_region
      _
    $region37: #{_encoder_forward_jit.1} parent=1 // pred_fallthru
      _
    // Predicated region
    $region38: #{_encoder_forward_jit.1} parent=1 // pred_check
      _
    $region39: #{_encoder_forward_jit.1} parent=1 // pred_check_branch
      %57 = sbr.rel (0) target = $region41
    $region40: #{_encoder_forward_jit.1} parent=1 // pred_region
      %59 = dma.done [#allocation3], 1024
    $region41: #{_encoder_forward_jit.1} parent=1 // pred_fallthru
      _
    // Predicated region
    $region42: #{_encoder_forward_jit.1} parent=1 // pred_check
      _
    $region43: #{_encoder_forward_jit.1} parent=1 // pred_check_branch
      %61 = sbr.rel (0) target = $region45
    $region44: #{_encoder_forward_jit.1} parent=1 // pred_region
      %63 = dma.done [#allocation5], 1024
    $region45: #{_encoder_forward_jit.1} parent=1 // pred_fallthru
      _
    %v64 = vld [vmem:[%s0] sm:$0xff]
    %v65 = vld [vmem:[%s0 + $0x8] sm:$0xff]
    %v66 = vpack.c.bf16 %v65, %v64
    %v67 = vld [vmem:[%s1] sm:$0xf]
    %v68 = vld [vmem:[%s1 + $0x4] sm:$0xf]
    %v69 = vld [vmem:[%s1 + $0x8] sm:$0xf]
    %v70 = vld [vmem:[%s1 + $0xc] sm:$0xf]
    %v71 = vld [vmem:[%s1 + $0x10] sm:$0xf]
    %v72 = vld [vmem:[%s1 + $0x14] sm:$0xf]
    %v73 = vld [vmem:[%s1 + $0x18] sm:$0xf]
    %v74 = vld [vmem:[%s1 + $0x1c] sm:$0xf]
    %v75 = vld [vmem:[%s1 + $0x20] sm:$0xf]
    %v76 = vld [vmem:[%s1 + $0x24] sm:$0xf]
    %v77 = vld [vmem:[%s1 + $0x28] sm:$0xf]
    %v78 = vld [vmem:[%s1 + $0x2c] sm:$0xf]
    %v79 = vld [vmem:[%s1 + $0x30] sm:$0xf]
    %v80 = vld [vmem:[%s1 + $0x34] sm:$0xf]
    %v81 = vld [vmem:[%s1 + $0x38] sm:$0xf]
    %v82 = vld [vmem:[%s1 + $0x3c] sm:$0xf]
    %v83 = vld [vmem:[%s2] sm:$0x1]
    %v85 = vperm.slane %v83, 0
    %v103 = vunpack.c.l.b16 %v67
    %v104 = vunpack.c.l.b16 %v68
    %v105 = vunpack.c.l.b16 %v69
    %v106 = vunpack.c.l.b16 %v70
    %v107 = vunpack.c.l.b16 %v71
    %v108 = vunpack.c.l.b16 %v72
    %v109 = vunpack.c.l.b16 %v73
    %v110 = vunpack.c.l.b16 %v74
    %v111 = vunpack.c.l.b16 %v75
    %v112 = vunpack.c.l.b16 %v76
    %v113 = vunpack.c.l.b16 %v77
    %v114 = vunpack.c.l.b16 %v78
    %v115 = vunpack.c.l.b16 %v79
    %v116 = vunpack.c.l.b16 %v80
    %v117 = vunpack.c.l.b16 %v81
    %v118 = vunpack.c.l.b16 %v82
    %v119 = vpack.c.b16 %v104, %v103
    %v120 = vpack.c.b16 %v106, %v105
    %v121 = vpack.c.b16 %v108, %v107
    %v122 = vpack.c.b16 %v110, %v109
    %v123 = vpack.c.b16 %v112, %v111
    %v124 = vpack.c.b16 %v114, %v113
    %v125 = vpack.c.b16 %v116, %v115
    %v126 = vpack.c.b16 %v118, %v117
    %135 = vmatpush.bf16.msra.mxu0 %v126
    %136 = vmatpush.bf16.msra.mxu0 %v125
    %137 = vmatpush.bf16.msra.mxu0 %v124
    %138 = vmatpush.bf16.msra.mxu0 %v123
    %139 = vmatpush.bf16.msra.mxu0 %v122
    %140 = vmatpush.bf16.msra.mxu0 %v121
    %141 = vmatpush.bf16.msra.mxu0 %v120
    %142 = vmatpush.bf16.msra.mxu0 %v119
    %143 = vmatmul.bf16.gmra.mxu0 %v66
    %v144 = vpop.f32.mrf.mxu0
    %v145 = vadd.f32 %v85, %v144
    %v146 = vpop.f32.mrf.mxu0
    %v147 = vadd.f32 %v85, %v146
    %148 = vdwg.mxu0
    %v149 = vtanh.pop %v145
    %v150 = vtanh.pop %v147
    %v151 = vpack.c.bf16 %v150, %v149
    %v152 = vld [vmem:[%s3] sm:$0xf]
    %v153 = vld [vmem:[%s3 + $0x4] sm:$0xf]
    %v154 = vld [vmem:[%s3 + $0x8] sm:$0xf]
    %v155 = vld [vmem:[%s3 + $0xc] sm:$0xf]
    %v156 = vld [vmem:[%s3 + $0x10] sm:$0xf]
    %v157 = vld [vmem:[%s3 + $0x14] sm:$0xf]
    %v158 = vld [vmem:[%s3 + $0x18] sm:$0xf]
    %v159 = vld [vmem:[%s3 + $0x1c] sm:$0xf]
    %v160 = vld [vmem:[%s3 + $0x20] sm:$0xf]
    %v161 = vld [vmem:[%s3 + $0x24] sm:$0xf]
    %v162 = vld [vmem:[%s3 + $0x28] sm:$0xf]
    %v163 = vld [vmem:[%s3 + $0x2c] sm:$0xf]
    %v164 = vld [vmem:[%s3 + $0x30] sm:$0xf]
    %v165 = vld [vmem:[%s3 + $0x34] sm:$0xf]
    %v166 = vld [vmem:[%s3 + $0x38] sm:$0xf]
    %v167 = vld [vmem:[%s3 + $0x3c] sm:$0xf]
    %v168 = vld [vmem:[%s4] sm:$0x1]
    %v170 = vperm.slane %v168, 0
    %v188 = vunpack.c.l.b16 %v152
    %v189 = vunpack.c.l.b16 %v153
    %v190 = vunpack.c.l.b16 %v154
    %v191 = vunpack.c.l.b16 %v155
    %v192 = vunpack.c.l.b16 %v156
    %v193 = vunpack.c.l.b16 %v157
    %v194 = vunpack.c.l.b16 %v158
    %v195 = vunpack.c.l.b16 %v159
    %v196 = vunpack.c.l.b16 %v160
    %v197 = vunpack.c.l.b16 %v161
    %v198 = vunpack.c.l.b16 %v162
    %v199 = vunpack.c.l.b16 %v163
    %v200 = vunpack.c.l.b16 %v164
    %v201 = vunpack.c.l.b16 %v165
    %v202 = vunpack.c.l.b16 %v166
    %v203 = vunpack.c.l.b16 %v167
    %v204 = vpack.c.b16 %v189, %v188
    %v205 = vpack.c.b16 %v191, %v190
    %v206 = vpack.c.b16 %v193, %v192
    %v207 = vpack.c.b16 %v195, %v194
    %v208 = vpack.c.b16 %v197, %v196
    %v209 = vpack.c.b16 %v199, %v198
    %v210 = vpack.c.b16 %v201, %v200
    %v211 = vpack.c.b16 %v203, %v202
    %220 = vmatpush.bf16.msra.mxu0 %v211
    %221 = vmatpush.bf16.msra.mxu0 %v210
    %222 = vmatpush.bf16.msra.mxu0 %v209
    %223 = vmatpush.bf16.msra.mxu0 %v208
    %224 = vmatpush.bf16.msra.mxu0 %v207
    %225 = vmatpush.bf16.msra.mxu0 %v206
    %226 = vmatpush.bf16.msra.mxu0 %v205
    %227 = vmatpush.bf16.msra.mxu0 %v204
    %228 = vmatmul.bf16.gmra.mxu0 %v151
    %v229 = vpop.f32.mrf.mxu0
    %v230 = vadd.f32 %v170, %v229
    %v231 = vpop.f32.mrf.mxu0
    %v232 = vadd.f32 %v170, %v231
    %233 = vdwg.mxu0
    %v234 = vtanh.pop %v230
    %v235 = vtanh.pop %v232
    %v236 = vpack.c.bf16 %v235, %v234
    %v237 = vld [vmem:[#allocation2] sm:$0xf]
    %v238 = vld [vmem:[#allocation2 + $0x4] sm:$0xf]
    %v239 = vld [vmem:[#allocation2 + $0x8] sm:$0xf]
    %v240 = vld [vmem:[#allocation2 + $0xc] sm:$0xf]
    %v241 = vld [vmem:[#allocation2 + $0x10] sm:$0xf]
    %v242 = vld [vmem:[#allocation2 + $0x14] sm:$0xf]
    %v243 = vld [vmem:[#allocation2 + $0x18] sm:$0xf]
    %v244 = vld [vmem:[#allocation2 + $0x1c] sm:$0xf]
    %v245 = vld [vmem:[#allocation2 + $0x20] sm:$0xf]
    %v246 = vld [vmem:[#allocation2 + $0x24] sm:$0xf]
    %v247 = vld [vmem:[#allocation2 + $0x28] sm:$0xf]
    %v248 = vld [vmem:[#allocation2 + $0x2c] sm:$0xf]
    %v249 = vld [vmem:[#allocation2 + $0x30] sm:$0xf]
    %v250 = vld [vmem:[#allocation2 + $0x34] sm:$0xf]
    %v251 = vld [vmem:[#allocation2 + $0x38] sm:$0xf]
    %v252 = vld [vmem:[#allocation2 + $0x3c] sm:$0xf]
    %v253 = vld [vmem:[%s6] sm:$0x1]
    %v255 = vperm.slane %v253, 0
    %v273 = vunpack.c.l.b16 %v237
    %v274 = vunpack.c.l.b16 %v238
    %v275 = vunpack.c.l.b16 %v239
    %v276 = vunpack.c.l.b16 %v240
    %v277 = vunpack.c.l.b16 %v241
    %v278 = vunpack.c.l.b16 %v242
    %v279 = vunpack.c.l.b16 %v243
    %v280 = vunpack.c.l.b16 %v244
    %v281 = vunpack.c.l.b16 %v245
    %v282 = vunpack.c.l.b16 %v246
    %v283 = vunpack.c.l.b16 %v247
    %v284 = vunpack.c.l.b16 %v248
    %v285 = vunpack.c.l.b16 %v249
    %v286 = vunpack.c.l.b16 %v250
    %v287 = vunpack.c.l.b16 %v251
    %v288 = vunpack.c.l.b16 %v252
    %v289 = vpack.c.b16 %v274, %v273
    %v290 = vpack.c.b16 %v276, %v275
    %v291 = vpack.c.b16 %v278, %v277
    %v292 = vpack.c.b16 %v280, %v279
    %v293 = vpack.c.b16 %v282, %v281
    %v294 = vpack.c.b16 %v284, %v283
    %v295 = vpack.c.b16 %v286, %v285
    %v296 = vpack.c.b16 %v288, %v287
    %305 = vmatpush.bf16.msra.mxu0 %v296
    %306 = vmatpush.bf16.msra.mxu0 %v295
    %307 = vmatpush.bf16.msra.mxu0 %v294
    %308 = vmatpush.bf16.msra.mxu0 %v293
    %309 = vmatpush.bf16.msra.mxu0 %v292
    %310 = vmatpush.bf16.msra.mxu0 %v291
    %311 = vmatpush.bf16.msra.mxu0 %v290
    %312 = vmatpush.bf16.msra.mxu0 %v289
    %313 = vmatmul.bf16.gmra.mxu0 %v236
    %v314 = vpop.f32.mrf.mxu0
    %v315 = vadd.f32 %v255, %v314
    %v316 = vpop.f32.mrf.mxu0
    %v317 = vadd.f32 %v255, %v316
    %318 = vdwg.mxu0
    %v319 = vtanh.pop %v315
    %v320 = vtanh.pop %v317
    %v321 = vpack.c.bf16 %v320, %v319
    %v322 = vld [vmem:[#allocation4] sm:$0xf]
    %v323 = vld [vmem:[#allocation4 + $0x4] sm:$0xf]
    %v324 = vld [vmem:[#allocation4 + $0x8] sm:$0xf]
    %v325 = vld [vmem:[#allocation4 + $0xc] sm:$0xf]
    %v326 = vld [vmem:[#allocation4 + $0x10] sm:$0xf]
    %v327 = vld [vmem:[#allocation4 + $0x14] sm:$0xf]
    %v328 = vld [vmem:[#allocation4 + $0x18] sm:$0xf]
    %v329 = vld [vmem:[#allocation4 + $0x1c] sm:$0xf]
    %v330 = vld [vmem:[#allocation4 + $0x20] sm:$0xf]
    %v331 = vld [vmem:[#allocation4 + $0x24] sm:$0xf]
    %v332 = vld [vmem:[#allocation4 + $0x28] sm:$0xf]
    %v333 = vld [vmem:[#allocation4 + $0x2c] sm:$0xf]
    %v334 = vld [vmem:[#allocation4 + $0x30] sm:$0xf]
    %v335 = vld [vmem:[#allocation4 + $0x34] sm:$0xf]
    %v336 = vld [vmem:[#allocation4 + $0x38] sm:$0xf]
    %v337 = vld [vmem:[#allocation4 + $0x3c] sm:$0xf]
    %v338 = vld [vmem:[%s8] sm:$0x1]
    %v340 = vperm.slane %v338, 0
    %v358 = vunpack.c.l.b16 %v322
    %v359 = vunpack.c.l.b16 %v323
    %v360 = vunpack.c.l.b16 %v324
    %v361 = vunpack.c.l.b16 %v325
    %v362 = vunpack.c.l.b16 %v326
    %v363 = vunpack.c.l.b16 %v327
    %v364 = vunpack.c.l.b16 %v328
    %v365 = vunpack.c.l.b16 %v329
    %v366 = vunpack.c.l.b16 %v330
    %v367 = vunpack.c.l.b16 %v331
    %v368 = vunpack.c.l.b16 %v332
    %v369 = vunpack.c.l.b16 %v333
    %v370 = vunpack.c.l.b16 %v334
    %v371 = vunpack.c.l.b16 %v335
    %v372 = vunpack.c.l.b16 %v336
    %v373 = vunpack.c.l.b16 %v337
    %v374 = vpack.c.b16 %v359, %v358
    %v375 = vpack.c.b16 %v361, %v360
    %v376 = vpack.c.b16 %v363, %v362
    %v377 = vpack.c.b16 %v365, %v364
    %v378 = vpack.c.b16 %v367, %v366
    %v379 = vpack.c.b16 %v369, %v368
    %v380 = vpack.c.b16 %v371, %v370
    %v381 = vpack.c.b16 %v373, %v372
    %390 = vmatpush.bf16.msra.mxu0 %v381
    %391 = vmatpush.bf16.msra.mxu0 %v380
    %392 = vmatpush.bf16.msra.mxu0 %v379
    %393 = vmatpush.bf16.msra.mxu0 %v378
    %394 = vmatpush.bf16.msra.mxu0 %v377
    %395 = vmatpush.bf16.msra.mxu0 %v376
    %396 = vmatpush.bf16.msra.mxu0 %v375
    %397 = vmatpush.bf16.msra.mxu0 %v374
    %398 = vmatmul.bf16.gmra.mxu0 %v321
    %v399 = vpop.f32.mrf.mxu0
    %v400 = vadd.f32 %v340, %v399
    %v401 = vpop.f32.mrf.mxu0
    %v402 = vadd.f32 %v340, %v401
    %403 = vdwg.mxu0
    %404 = vst [vmem:[%s9] sm:$0xff] %v400
    %405 = vst [vmem:[%s9 + $0x8] sm:$0xff] %v402
    // Predicated region
    $region46: #{_encoder_forward_jit.1} parent=1 // pred_check
      _
    $region47: #{_encoder_forward_jit.1} parent=1 // pred_check_branch
      %407 = sbr.rel (0) target = $region49
    $region48: #{_encoder_forward_jit.1} parent=1 // pred_region
      _
    $region49: #{_encoder_forward_jit.1} parent=1 // pred_fallthru
      _
    // Predicated region
    $region50: #{_encoder_forward_jit.1} parent=1 // pred_check
      _
    $region51: #{_encoder_forward_jit.1} parent=1 // pred_check_branch
      %409 = sbr.rel (0) target = $region53
    $region52: #{_encoder_forward_jit.1} parent=1 // pred_region
      _
    $region53: #{_encoder_forward_jit.1} parent=1 // pred_fallthru
      _
    %410 = vsyncpa [#allocation3], 1
    %411 = vsyncpa [#allocation5], 1

// kernel: _encoder_forward_jit.1
$region0: #{_encoder_forward_jit.1}
  #allocation0 [shape = 'u32[]', space=smem, size = 0x4, offset = 0x4, fixed_abs, tag = 'smem constant byte address 0x4 - core index']
  #allocation1 [shape = 'u32[72,128]{1,0:T(1,128)}', space=vmem, size = 0x9000, scoped, tag = 'internal scratch']
  %s0 = inlined_call_operand.vmem [shape: f32[16,128], index: 0, kind: input, shape index: {}]
  %s1 = inlined_call_operand.vmem [shape: bf16[128,128], index: 1, kind: input, shape index: {}]
  %s2 = inlined_call_operand.vmem [shape: f32[1,128], index: 2, kind: input, shape index: {}]
  %s3 = inlined_call_operand.vmem [shape: bf16[128,128], index: 3, kind: input, shape index: {}]
  %s4 = inlined_call_operand.vmem [shape: f32[1,128], index: 4, kind: input, shape index: {}]
  %s5 = inlined_call_operand.hbm [shape: bf16[128,128], index: 5, kind: input, shape index: {}]
  %s6 = inlined_call_operand.vmem [shape: f32[1,128], index: 6, kind: input, shape index: {}]
  %s7 = inlined_call_operand.hbm [shape: bf16[128,128], index: 7, kind: input, shape index: {}]
  %s8 = inlined_call_operand.vmem [shape: f32[1,128], index: 8, kind: input, shape index: {}]
  %s9 = inlined_call_operand.vmem [shape: f32[16,128], index: 9, kind: output, shape index: {}]
  %s10 = sld [smem:[#allocation0]]
  $region54: #{_encoder_forward_jit.1} parent=0
    _
  %s12 = ssub.s32 1, %s10
  %s13 = scalar_select 0, %s12, %s10
  $region1: #{_encoder_forward_jit.1} parent=0
    #allocation2 [shape = 'u8[32768]{0}', space=vmem, size = 0x8000, scoped, tag = 'input window, operand 5, single buffered']
    #allocation3 [shape = 's32[1]{0}', space=sflag, size = 0x4, scoped, tag = 'scoped memory for _encoder_forward_jit.1']
    #allocation4 [shape = 'u8[32768]{0}', space=vmem, size = 0x8000, scoped, tag = 'input window, operand 7, single buffered']
    #allocation5 [shape = 's32[1]{0}', space=sflag, size = 0x4, scoped, tag = 'scoped memory for _encoder_forward_jit.1']
    %14 = vsyncpa [#allocation3], 0
    %15 = vsyncpa [#allocation5], 0
    // Predicated region
    $region2: #{_encoder_forward_jit.1} parent=1 // pred_check
      _
    $region3: #{_encoder_forward_jit.1} parent=1 // pred_check_branch
      %17 = sbr.rel (0) target = $region5
    $region4: #{_encoder_forward_jit.1} parent=1 // pred_region
      _
    $region5: #{_encoder_forward_jit.1} parent=1 // pred_fallthru
      _
    // Predicated region
    $region6: #{_encoder_forward_jit.1} parent=1 // pred_check
      _
    $region7: #{_encoder_forward_jit.1} parent=1 // pred_check_branch
      %19 = sbr.rel (0) target = $region9
    $region8: #{_encoder_forward_jit.1} parent=1 // pred_region
      _
    $region9: #{_encoder_forward_jit.1} parent=1 // pred_fallthru
      _
    // Predicated region
    $region10: #{_encoder_forward_jit.1} parent=1 // pred_check
      _
    $region11: #{_encoder_forward_jit.1} parent=1 // pred_check_branch
      %21 = sbr.rel (0) target = $region13
    $region12: #{_encoder_forward_jit.1} parent=1 // pred_region
      _
    $region13: #{_encoder_forward_jit.1} parent=1 // pred_fallthru
      _
    // Predicated region
    $region14: #{_encoder_forward_jit.1} parent=1 // pred_check
      _
    $region15: #{_encoder_forward_jit.1} parent=1 // pred_check_branch
      %23 = sbr.rel (0) target = $region17
    $region16: #{_encoder_forward_jit.1} parent=1 // pred_region
      _
    $region17: #{_encoder_forward_jit.1} parent=1 // pred_fallthru
      _
    // Predicated region
    $region18: #{_encoder_forward_jit.1} parent=1 // pred_check
      _
    $region19: #{_encoder_forward_jit.1} parent=1 // pred_check_branch
      %25 = sbr.rel (0) target = $region21
    $region20: #{_encoder_forward_jit.1} parent=1 // pred_region
      _
    $region21: #{_encoder_forward_jit.1} parent=1 // pred_fallthru
      _
    // Predicated region
    $region22: #{_encoder_forward_jit.1} parent=1 // pred_check
      _
    $region23: #{_encoder_forward_jit.1} parent=1 // pred_check_branch
      %27 = sbr.rel (0) target = $region25
    $region24: #{_encoder_forward_jit.1} parent=1 // pred_region
      %29 = vsyncadd [#allocation3], 0
      %s30 = sshll.u32 %s5, 4
      %s31 = int_to_ptr.hbm [resolvable:$true] %s30
      %s32 = sshll.u32 [#allocation2], 4
      %s33 = int_to_ptr.vmem [resolvable:$true] %s32
      %38 = dma.hbm_to_vmem [thread:$0]  %s31, 1024, %s33, [#allocation3], 64, 64, 4
    $region25: #{_encoder_forward_jit.1} parent=1 // pred_fallthru
      _
    // Predicated region
    $region26: #{_encoder_forward_jit.1} parent=1 // pred_check
      _
    $region27: #{_encoder_forward_jit.1} parent=1 // pred_check_branch
      %40 = sbr.rel (0) target = $region29
    $region28: #{_encoder_forward_jit.1} parent=1 // pred_region
      _
    $region29: #{_encoder_forward_jit.1} parent=1 // pred_fallthru
      _
    // Predicated region
    $region30: #{_encoder_forward_jit.1} parent=1 // pred_check
      _
    $region31: #{_encoder_forward_jit.1} parent=1 // pred_check_branch
      %42 = sbr.rel (0) target = $region33
    $region32: #{_encoder_forward_jit.1} parent=1 // pred_region
      %44 = vsyncadd [#allocation5], 0
      %s45 = sshll.u32 %s7, 4
      %s46 = int_to_ptr.hbm [resolvable:$true] %s45
      %s47 = sshll.u32 [#allocation4], 4
      %s48 = int_to_ptr.vmem [resolvable:$true] %s47
      %53 = dma.hbm_to_vmem [thread:$0]  %s46, 1024, %s48, [#allocation5], 64, 64, 4
    $region33: #{_encoder_forward_jit.1} parent=1 // pred_fallthru
      _
    // Predicated region
    $region34: #{_encoder_forward_jit.1} parent=1 // pred_check
      _
    $region35: #{_encoder_forward_jit.1} parent=1 // pred_check_branch
      %55 = sbr.rel (0) target = $region37
    $region36: #{_encoder_forward_jit.1} parent=1 // pred_region
      _
    $region37: #{_encoder_forward_jit.1} parent=1 // pred_fallthru
      _
    // Predicated region
    $region38: #{_encoder_forward_jit.1} parent=1 // pred_check
      _
    $region39: #{_encoder_forward_jit.1} parent=1 // pred_check_branch
      %57 = sbr.rel (0) target = $region41
    $region40: #{_encoder_forward_jit.1} parent=1 // pred_region
      %59 = dma.done [#allocation3], 1024
    $region41: #{_encoder_forward_jit.1} parent=1 // pred_fallthru
      _
    // Predicated region
    $region42: #{_encoder_forward_jit.1} parent=1 // pred_check
      _
    $region43: #{_encoder_forward_jit.1} parent=1 // pred_check_branch
      %61 = sbr.rel (0) target = $region45
    $region44: #{_encoder_forward_jit.1} parent=1 // pred_region
      %63 = dma.done [#allocation5], 1024
    $region45: #{_encoder_forward_jit.1} parent=1 // pred_fallthru
      _
    %v64 = vld [vmem:[%s0] sm:$0xff]
    %v65 = vld [vmem:[%s0 + $0x8] sm:$0xff]
    %v66 = vpack.c.bf16 %v65, %v64
    %v67 = vld [vmem:[%s1] sm:$0xf]
    %v68 = vld [vmem:[%s1 + $0x4] sm:$0xf]
    %v69 = vld [vmem:[%s1 + $0x8] sm:$0xf]
    %v70 = vld [vmem:[%s1 + $0xc] sm:$0xf]
    %v71 = vld [vmem:[%s1 + $0x10] sm:$0xf]
    %v72 = vld [vmem:[%s1 + $0x14] sm:$0xf]
    %v73 = vld [vmem:[%s1 + $0x18] sm:$0xf]
    %v74 = vld [vmem:[%s1 + $0x1c] sm:$0xf]
    %v75 = vld [vmem:[%s1 + $0x20] sm:$0xf]
    %v76 = vld [vmem:[%s1 + $0x24] sm:$0xf]
    %v77 = vld [vmem:[%s1 + $0x28] sm:$0xf]
    %v78 = vld [vmem:[%s1 + $0x2c] sm:$0xf]
    %v79 = vld [vmem:[%s1 + $0x30] sm:$0xf]
    %v80 = vld [vmem:[%s1 + $0x34] sm:$0xf]
    %v81 = vld [vmem:[%s1 + $0x38] sm:$0xf]
    %v82 = vld [vmem:[%s1 + $0x3c] sm:$0xf]
    %v83 = vld [vmem:[%s2] sm:$0x1]
    %v85 = vperm.slane %v83, 0
    %v103 = vunpack.c.l.b16 %v67
    %v104 = vunpack.c.l.b16 %v68
    %v105 = vunpack.c.l.b16 %v69
    %v106 = vunpack.c.l.b16 %v70
    %v107 = vunpack.c.l.b16 %v71
    %v108 = vunpack.c.l.b16 %v72
    %v109 = vunpack.c.l.b16 %v73
    %v110 = vunpack.c.l.b16 %v74
    %v111 = vunpack.c.l.b16 %v75
    %v112 = vunpack.c.l.b16 %v76
    %v113 = vunpack.c.l.b16 %v77
    %v114 = vunpack.c.l.b16 %v78
    %v115 = vunpack.c.l.b16 %v79
    %v116 = vunpack.c.l.b16 %v80
    %v117 = vunpack.c.l.b16 %v81
    %v118 = vunpack.c.l.b16 %v82
    %v119 = vpack.c.b16 %v104, %v103
    %v120 = vpack.c.b16 %v106, %v105
    %v121 = vpack.c.b16 %v108, %v107
    %v122 = vpack.c.b16 %v110, %v109
    %v123 = vpack.c.b16 %v112, %v111
    %v124 = vpack.c.b16 %v114, %v113
    %v125 = vpack.c.b16 %v116, %v115
    %v126 = vpack.c.b16 %v118, %v117
    %135 = vmatpush.bf16.msra.mxu0 %v126
    %136 = vmatpush.bf16.msra.mxu0 %v125
    %137 = vmatpush.bf16.msra.mxu0 %v124
    %138 = vmatpush.bf16.msra.mxu0 %v123
    %139 = vmatpush.bf16.msra.mxu0 %v122
    %140 = vmatpush.bf16.msra.mxu0 %v121
    %141 = vmatpush.bf16.msra.mxu0 %v120
    %142 = vmatpush.bf16.msra.mxu0 %v119
    %143 = vmatmul.bf16.gmra.mxu0 %v66
    %v144 = vpop.f32.mrf.mxu0
    %v145 = vadd.f32 %v85, %v144
    %v146 = vpop.f32.mrf.mxu0
    %v147 = vadd.f32 %v85, %v146
    %148 = vdwg.mxu0
    %v149 = vtanh.pop %v145
    %v150 = vtanh.pop %v147
    %v151 = vpack.c.bf16 %v150, %v149
    %v152 = vld [vmem:[%s3] sm:$0xf]
    %v153 = vld [vmem:[%s3 + $0x4] sm:$0xf]
    %v154 = vld [vmem:[%s3 + $0x8] sm:$0xf]
    %v155 = vld [vmem:[%s3 + $0xc] sm:$0xf]
    %v156 = vld [vmem:[%s3 + $0x10] sm:$0xf]
    %v157 = vld [vmem:[%s3 + $0x14] sm:$0xf]
    %v158 = vld [vmem:[%s3 + $0x18] sm:$0xf]
    %v159 = vld [vmem:[%s3 + $0x1c] sm:$0xf]
    %v160 = vld [vmem:[%s3 + $0x20] sm:$0xf]
    %v161 = vld [vmem:[%s3 + $0x24] sm:$0xf]
    %v162 = vld [vmem:[%s3 + $0x28] sm:$0xf]
    %v163 = vld [vmem:[%s3 + $0x2c] sm:$0xf]
    %v164 = vld [vmem:[%s3 + $0x30] sm:$0xf]
    %v165 = vld [vmem:[%s3 + $0x34] sm:$0xf]
    %v166 = vld [vmem:[%s3 + $0x38] sm:$0xf]
    %v167 = vld [vmem:[%s3 + $0x3c] sm:$0xf]
    %v168 = vld [vmem:[%s4] sm:$0x1]
    %v170 = vperm.slane %v168, 0
    %v188 = vunpack.c.l.b16 %v152
    %v189 = vunpack.c.l.b16 %v153
    %v190 = vunpack.c.l.b16 %v154
    %v191 = vunpack.c.l.b16 %v155
    %v192 = vunpack.c.l.b16 %v156
    %v193 = vunpack.c.l.b16 %v157
    %v194 = vunpack.c.l.b16 %v158
    %v195 = vunpack.c.l.b16 %v159
    %v196 = vunpack.c.l.b16 %v160
    %v197 = vunpack.c.l.b16 %v161
    %v198 = vunpack.c.l.b16 %v162
    %v199 = vunpack.c.l.b16 %v163
    %v200 = vunpack.c.l.b16 %v164
    %v201 = vunpack.c.l.b16 %v165
    %v202 = vunpack.c.l.b16 %v166
    %v203 = vunpack.c.l.b16 %v167
    %v204 = vpack.c.b16 %v189, %v188
    %v205 = vpack.c.b16 %v191, %v190
    %v206 = vpack.c.b16 %v193, %v192
    %v207 = vpack.c.b16 %v195, %v194
    %v208 = vpack.c.b16 %v197, %v196
    %v209 = vpack.c.b16 %v199, %v198
    %v210 = vpack.c.b16 %v201, %v200
    %v211 = vpack.c.b16 %v203, %v202
    %220 = vmatpush.bf16.msra.mxu0 %v211
    %221 = vmatpush.bf16.msra.mxu0 %v210
    %222 = vmatpush.bf16.msra.mxu0 %v209
    %223 = vmatpush.bf16.msra.mxu0 %v208
    %224 = vmatpush.bf16.msra.mxu0 %v207
    %225 = vmatpush.bf16.msra.mxu0 %v206
    %226 = vmatpush.bf16.msra.mxu0 %v205
    %227 = vmatpush.bf16.msra.mxu0 %v204
    %228 = vmatmul.bf16.gmra.mxu0 %v151
    %v229 = vpop.f32.mrf.mxu0
    %v230 = vadd.f32 %v170, %v229
    %v231 = vpop.f32.mrf.mxu0
    %v232 = vadd.f32 %v170, %v231
    %233 = vdwg.mxu0
    %v234 = vtanh.pop %v230
    %v235 = vtanh.pop %v232
    %v236 = vpack.c.bf16 %v235, %v234
    %v237 = vld [vmem:[#allocation2] sm:$0xf]
    %v238 = vld [vmem:[#allocation2 + $0x4] sm:$0xf]
    %v239 = vld [vmem:[#allocation2 + $0x8] sm:$0xf]
    %v240 = vld [vmem:[#allocation2 + $0xc] sm:$0xf]
    %v241 = vld [vmem:[#allocation2 + $0x10] sm:$0xf]
    %v242 = vld [vmem:[#allocation2 + $0x14] sm:$0xf]
    %v243 = vld [vmem:[#allocation2 + $0x18] sm:$0xf]
    %v244 = vld [vmem:[#allocation2 + $0x1c] sm:$0xf]
    %v245 = vld [vmem:[#allocation2 + $0x20] sm:$0xf]
    %v246 = vld [vmem:[#allocation2 + $0x24] sm:$0xf]
    %v247 = vld [vmem:[#allocation2 + $0x28] sm:$0xf]
    %v248 = vld [vmem:[#allocation2 + $0x2c] sm:$0xf]
    %v249 = vld [vmem:[#allocation2 + $0x30] sm:$0xf]
    %v250 = vld [vmem:[#allocation2 + $0x34] sm:$0xf]
    %v251 = vld [vmem:[#allocation2 + $0x38] sm:$0xf]
    %v252 = vld [vmem:[#allocation2 + $0x3c] sm:$0xf]
    %v253 = vld [vmem:[%s6] sm:$0x1]
    %v255 = vperm.slane %v253, 0
    %v273 = vunpack.c.l.b16 %v237
    %v274 = vunpack.c.l.b16 %v238
    %v275 = vunpack.c.l.b16 %v239
    %v276 = vunpack.c.l.b16 %v240
    %v277 = vunpack.c.l.b16 %v241
    %v278 = vunpack.c.l.b16 %v242
    %v279 = vunpack.c.l.b16 %v243
    %v280 = vunpack.c.l.b16 %v244
    %v281 = vunpack.c.l.b16 %v245
    %v282 = vunpack.c.l.b16 %v246
    %v283 = vunpack.c.l.b16 %v247
    %v284 = vunpack.c.l.b16 %v248
    %v285 = vunpack.c.l.b16 %v249
    %v286 = vunpack.c.l.b16 %v250
    %v287 = vunpack.c.l.b16 %v251
    %v288 = vunpack.c.l.b16 %v252
    %v289 = vpack.c.b16 %v274, %v273
    %v290 = vpack.c.b16 %v276, %v275
    %v291 = vpack.c.b16 %v278, %v277
    %v292 = vpack.c.b16 %v280, %v279
    %v293 = vpack.c.b16 %v282, %v281
    %v294 = vpack.c.b16 %v284, %v283
    %v295 = vpack.c.b16 %v286, %v285
    %v296 = vpack.c.b16 %v288, %v287
    %305 = vmatpush.bf16.msra.mxu0 %v296
    %306 = vmatpush.bf16.msra.mxu0 %v295
    %307 = vmatpush.bf16.msra.mxu0 %v294
    %308 = vmatpush.bf16.msra.mxu0 %v293
    %309 = vmatpush.bf16.msra.mxu0 %v292
    %310 = vmatpush.bf16.msra.mxu0 %v291
    %311 = vmatpush.bf16.msra.mxu0 %v290
    %312 = vmatpush.bf16.msra.mxu0 %v289
    %313 = vmatmul.bf16.gmra.mxu0 %v236
    %v314 = vpop.f32.mrf.mxu0
    %v315 = vadd.f32 %v255, %v314
    %v316 = vpop.f32.mrf.mxu0
    %v317 = vadd.f32 %v255, %v316
    %318 = vdwg.mxu0
    %v319 = vtanh.pop %v315
    %v320 = vtanh.pop %v317
    %v321 = vpack.c.bf16 %v320, %v319
    %v322 = vld [vmem:[#allocation4] sm:$0xf]
    %v323 = vld [vmem:[#allocation4 + $0x4] sm:$0xf]
    %v324 = vld [vmem:[#allocation4 + $0x8] sm:$0xf]
    %v325 = vld [vmem:[#allocation4 + $0xc] sm:$0xf]
    %v326 = vld [vmem:[#allocation4 + $0x10] sm:$0xf]
    %v327 = vld [vmem:[#allocation4 + $0x14] sm:$0xf]
    %v328 = vld [vmem:[#allocation4 + $0x18] sm:$0xf]
    %v329 = vld [vmem:[#allocation4 + $0x1c] sm:$0xf]
    %v330 = vld [vmem:[#allocation4 + $0x20] sm:$0xf]
    %v331 = vld [vmem:[#allocation4 + $0x24] sm:$0xf]
    %v332 = vld [vmem:[#allocation4 + $0x28] sm:$0xf]
    %v333 = vld [vmem:[#allocation4 + $0x2c] sm:$0xf]
    %v334 = vld [vmem:[#allocation4 + $0x30] sm:$0xf]
    %v335 = vld [vmem:[#allocation4 + $0x34] sm:$0xf]
    %v336 = vld [vmem:[#allocation4 + $0x38] sm:$0xf]
    %v337 = vld [vmem:[#allocation4 + $0x3c] sm:$0xf]
    %v338 = vld [vmem:[%s8] sm:$0x1]
    %v340 = vperm.slane %v338, 0
    %v358 = vunpack.c.l.b16 %v322
    %v359 = vunpack.c.l.b16 %v323
    %v360 = vunpack.c.l.b16 %v324
    %v361 = vunpack.c.l.b16 %v325
    %v362 = vunpack.c.l.b16 %v326
    %v363 = vunpack.c.l.b16 %v327
    %v364 = vunpack.c.l.b16 %v328
    %v365 = vunpack.c.l.b16 %v329
    %v366 = vunpack.c.l.b16 %v330
    %v367 = vunpack.c.l.b16 %v331
    %v368 = vunpack.c.l.b16 %v332
    %v369 = vunpack.c.l.b16 %v333
    %v370 = vunpack.c.l.b16 %v334
    %v371 = vunpack.c.l.b16 %v335
    %v372 = vunpack.c.l.b16 %v336
    %v373 = vunpack.c.l.b16 %v337
    %v374 = vpack.c.b16 %v359, %v358
    %v375 = vpack.c.b16 %v361, %v360
    %v376 = vpack.c.b16 %v363, %v362
    %v377 = vpack.c.b16 %v365, %v364
    %v378 = vpack.c.b16 %v367, %v366
    %v379 = vpack.c.b16 %v369, %v368
    %v380 = vpack.c.b16 %v371, %v370
    %v381 = vpack.c.b16 %v373, %v372
    %390 = vmatpush.bf16.msra.mxu0 %v381
    %391 = vmatpush.bf16.msra.mxu0 %v380
    %392 = vmatpush.bf16.msra.mxu0 %v379
    %393 = vmatpush.bf16.msra.mxu0 %v378
    %394 = vmatpush.bf16.msra.mxu0 %v377
    %395 = vmatpush.bf16.msra.mxu0 %v376
    %396 = vmatpush.bf16.msra.mxu0 %v375
    %397 = vmatpush.bf16.msra.mxu0 %v374
    %398 = vmatmul.bf16.gmra.mxu0 %v321
    %v399 = vpop.f32.mrf.mxu0
    %v400 = vadd.f32 %v340, %v399
    %v401 = vpop.f32.mrf.mxu0
    %v402 = vadd.f32 %v340, %v401
    %403 = vdwg.mxu0
    %404 = vst [vmem:[%s9] sm:$0xff] %v400
    %405 = vst [vmem:[%s9 + $0x8] sm:$0xff] %v402
    // Predicated region
    $region46: #{_encoder_forward_jit.1} parent=1 // pred_check
      _
    $region47: #{_encoder_forward_jit.1} parent=1 // pred_check_branch
      %407 = sbr.rel (0) target = $region49
    $region48: #{_encoder_forward_jit.1} parent=1 // pred_region
      _
    $region49: #{_encoder_forward_jit.1} parent=1 // pred_fallthru
      _
    // Predicated region
    $region50: #{_encoder_forward_jit.1} parent=1 // pred_check
      _
    $region51: #{_encoder_forward_jit.1} parent=1 // pred_check_branch
      %409 = sbr.rel (0) target = $region53
    $region52: #{_encoder_forward_jit.1} parent=1 // pred_region
      _
    $region53: #{_encoder_forward_jit.1} parent=1 // pred_fallthru
      _
    %410 = vsyncpa [#allocation3], 1
    %411 = vsyncpa [#allocation5], 1

</llo_original>
